<compile_context>
chip_gen: v6e
topology: v6e:2x2x1
jax: 0.10.0
libtpu: 0.0.40
codegen_flags: <defaults>
</compile_context>

<pallas_src>
import jax
import jax.numpy as jnp
from jax import lax
from jax.experimental import pallas as pl
from jax.experimental.pallas import tpu as pltpu

_LANE = 128      # vreg lane width
_SUBLANE = 8     # vreg sublane width (f32)


def _round_up(n, m):
    return ((n + m - 1) // m) * m


def _forget_mult_kernel(f_ref, x_ref, h0_ref, o_ref, h_scratch):
    tc = pl.program_id(1)

    # New BH tile's time sweep starts: load the initial hidden state.
    # (BH is the leading/parallel grid axis; T chunks are the inner,
    # sequential axis, so the scratch carries state across chunks.)
    @pl.when(tc == 0)
    def _():
        h_scratch[...] = h0_ref[...].astype(jnp.float32)

    t_chunk = f_ref.shape[0]

    def body(t, h_prev):
        ft = f_ref[pl.ds(t, 1), :].astype(jnp.float32)   # (1, BH_TILE)
        xt = x_ref[pl.ds(t, 1), :].astype(jnp.float32)   # (1, BH_TILE)
        h = h_prev + ft * (xt - h_prev)                  # 3 VALU ops, no 1-f bcast
        o_ref[pl.ds(t, 1), :] = h.astype(o_ref.dtype)
        return h                                         # carry stays in vregs

    h_final = lax.fori_loop(0, t_chunk, body, h_scratch[...],
                            unroll=min(8, t_chunk))
    h_scratch[...] = h_final                             # one scratch write / chunk


def forget_mult(f, x, hidden_init=None, *, t_chunk=128, bh_tile=4096):
    """ForgetMult forward.  f, x: (T, B, H); hidden_init: (B, H) or None."""
    T, B, H = x.shape
    assert f.shape == x.shape, "f and x must have the same shape"
    out_dtype = x.dtype
    if hidden_init is None:
        hidden_init = jnp.zeros((B, H), dtype=out_dtype)
    else:
        hidden_init = hidden_init.astype(out_dtype)

    # --- lane-dense flatten: (T, B, H) -> (T, BH), pad BH to lane/tile width ---
    BH = B * H
    f2 = f.reshape(T, BH)
    x2 = x.reshape(T, BH)
    h02 = hidden_init.reshape(1, BH)

    bh_pad = _round_up(BH, _LANE)
    bh_tile = _round_up(min(bh_tile, bh_pad), _LANE)
    bh_pad = _round_up(bh_pad, bh_tile)

    # --- chunk the time axis; keep blocks (8, 128)-tileable ---
    t_chunk = _round_up(min(t_chunk, _round_up(T, _SUBLANE)), _SUBLANE)
    t_pad = _round_up(T, t_chunk)

    if bh_pad != BH or t_pad != T:
        f2 = jnp.pad(f2, ((0, t_pad - T), (0, bh_pad - BH)))
        x2 = jnp.pad(x2, ((0, t_pad - T), (0, bh_pad - BH)))
        h02 = jnp.pad(h02, ((0, 0), (0, bh_pad - BH)))

    num_bh = bh_pad // bh_tile
    num_tc = t_pad // t_chunk

    grid_spec = pltpu.PrefetchScalarGridSpec(
        num_scalar_prefetch=0,
        grid=(num_bh, num_tc),    # BH tiles outer (parallel), T chunks inner (sequential)
        in_specs=[
            pl.BlockSpec((t_chunk, bh_tile), lambda bh, tc: (tc, bh)),   # f chunk
            pl.BlockSpec((t_chunk, bh_tile), lambda bh, tc: (tc, bh)),   # x chunk
            pl.BlockSpec((1, bh_tile), lambda bh, tc: (0, bh)),          # hidden_init
        ],
        out_specs=pl.BlockSpec((t_chunk, bh_tile), lambda bh, tc: (tc, bh)),
        scratch_shapes=[pltpu.VMEM((1, bh_tile), jnp.float32)],          # carried h (f32)
    )

    out = pl.pallas_call(
        _forget_mult_kernel,
        out_shape=jax.ShapeDtypeStruct((t_pad, bh_pad), out_dtype),
        grid_spec=grid_spec,
        compiler_params=pltpu.CompilerParams(
            dimension_semantics=("parallel", "arbitrary"),  # BH parallel, T sequential
            vmem_limit_bytes=48 * 1024 * 1024,              # fits v7x 64MiB, plenty for v5e/v6e
        ),
    )(f2, x2, h02)

    return out[:T, :BH].reshape(T, B, H)


def _forget_mult_ref(f, x, hidden_init):
    """Pure-JAX reference (lax.scan) for verification."""
    def step(h_prev, ft_xt):
        ft, xt = ft_xt
        h = ft * xt + (1.0 - ft) * h_prev
        return h, h
    _, hs = lax.scan(step, hidden_init, (f, x))
    return hs


if __name__ == "__main__":
    key = jax.random.PRNGKey(0)
    k_f, k_x, k_h = jax.random.split(key, 3)

    # Small shapes consistent with the module (seq=8, batch=2, hidden=32).
    T, B, H = 8, 2, 32
    f = jax.nn.sigmoid(jax.random.normal(k_f, (T, B, H), dtype=jnp.float32))
    x = jax.random.normal(k_x, (T, B, H), dtype=jnp.float32)
    h0 = jax.random.normal(k_h, (B, H), dtype=jnp.float32)

    # hidden_init provided
    out = jax.block_until_ready(forget_mult(f, x, h0))
    ref = _forget_mult_ref(f, x, h0)
    assert out.shape == (T, B, H)
    assert jnp.allclose(out, ref, atol=1e-5, rtol=1e-5)

    # hidden_init = None (defaults to zeros, as in the PyTorch module)
    out0 = jax.block_until_ready(forget_mult(f, x, None))
    ref0 = _forget_mult_ref(f, x, jnp.zeros((B, H), jnp.float32))
    assert jnp.allclose(out0, ref0, atol=1e-5, rtol=1e-5)

    # Exercise multi-chunk time carry + BH tiling/padding (T not a multiple of
    # the chunk, BH not a multiple of 128, >1 BH tile).
    T2, B2, H2 = 40, 3, 100
    k1, k2, k3 = jax.random.split(jax.random.PRNGKey(1), 3)
    f2 = jax.nn.sigmoid(jax.random.normal(k1, (T2, B2, H2), dtype=jnp.float32))
    x2 = jax.random.normal(k2, (T2, B2, H2), dtype=jnp.float32)
    h02 = jax.random.normal(k3, (B2, H2), dtype=jnp.float32)
    out2 = jax.block_until_ready(forget_mult(f2, x2, h02, t_chunk=8, bh_tile=128))
    ref2 = _forget_mult_ref(f2, x2, h02)
    assert jnp.allclose(out2, ref2, atol=1e-5, rtol=1e-5)

    print("KERNEL_OK")
</pallas_src>

<mosaic_0001>
module attributes {stable_mosaic.version = 11 : i64} {
  func.func @_forget_mult_kernel(%arg0: i32, %arg1: i32, %arg2: memref<8x128xf32, #tpu.memory_space<vmem>>, %arg3: memref<8x128xf32, #tpu.memory_space<vmem>>, %arg4: memref<1x128xf32, #tpu.memory_space<vmem>>, %arg5: memref<8x128xf32, #tpu.memory_space<vmem>>, %arg6: memref<1x128xf32, #tpu.memory_space<vmem>>) attributes {dimension_semantics = [#tpu.dimension_semantics<parallel>, #tpu.dimension_semantics<arbitrary>], iteration_bounds = array<i64: 1, 1>, scalar_prefetch = 0 : i64, scratch_operands = 1 : i64, tpu.core_type = #tpu.core_type<tc>, window_params = [{transform_indices = @transform_0, window_bounds = array<i64: 8, 128>}, {transform_indices = @transform_1, window_bounds = array<i64: 8, 128>}, {transform_indices = @transform_2, window_bounds = array<i64: 1, 128>}, {transform_indices = @transform_3, window_bounds = array<i64: 8, 128>}]} {
    %c0_i32 = arith.constant 0 : i32
    %0 = arith.cmpi eq, %arg1, %c0_i32 : i32
    %1 = arith.extui %0 : i1 to i32
    %c0_i32_0 = arith.constant 0 : i32
    %2 = arith.cmpi ne, %1, %c0_i32_0 : i32
    scf.if %2 {
      %c0_29 = arith.constant 0 : index
      %c0_30 = arith.constant 0 : index
      %77 = vector.load %arg4[%c0_29, %c0_30] : memref<1x128xf32, #tpu.memory_space<vmem>>, vector<1x128xf32>
      %c0_31 = arith.constant 0 : index
      %c0_32 = arith.constant 0 : index
      %78 = vector.load %arg6[%c0_31, %c0_32] : memref<1x128xf32, #tpu.memory_space<vmem>>, vector<1x128xf32>
      tpu.vector_store %arg6[%c0_31, %c0_32], %77 {strides = array<i32>} : memref<1x128xf32, #tpu.memory_space<vmem>>, vector<1x128xf32>,
    } else {
    }
    %c0 = arith.constant 0 : index
    %c0_1 = arith.constant 0 : index
    %3 = vector.load %arg6[%c0, %c0_1] : memref<1x128xf32, #tpu.memory_space<vmem>>, vector<1x128xf32>
    %c0_i32_2 = arith.constant 0 : i32
    %4 = arith.index_cast %c0_i32_2 : i32 to index
    %c0_3 = arith.constant 0 : index
    %5 = vector.load %arg2[%4, %c0_3] : memref<8x128xf32, #tpu.memory_space<vmem>>, vector<1x128xf32>
    %6 = arith.index_cast %c0_i32_2 : i32 to index
    %c0_4 = arith.constant 0 : index
    %7 = vector.load %arg3[%6, %c0_4] : memref<8x128xf32, #tpu.memory_space<vmem>>, vector<1x128xf32>
    %8 = arith.subf %7, %3 : vector<1x128xf32>
    %9 = arith.mulf %5, %8 : vector<1x128xf32>
    %10 = arith.addf %3, %9 : vector<1x128xf32>
    %11 = arith.index_cast %c0_i32_2 : i32 to index
    %c0_5 = arith.constant 0 : index
    %12 = vector.load %arg5[%11, %c0_5] : memref<8x128xf32, #tpu.memory_space<vmem>>, vector<1x128xf32>
    tpu.vector_store %arg5[%11, %c0_5], %10 {strides = array<i32>} : memref<8x128xf32, #tpu.memory_space<vmem>>, vector<1x128xf32>,
    %c1_i32 = arith.constant 1 : i32
    %13 = arith.index_cast %c1_i32 : i32 to index
    %c0_6 = arith.constant 0 : index
    %14 = vector.load %arg2[%13, %c0_6] : memref<8x128xf32, #tpu.memory_space<vmem>>, vector<1x128xf32>
    %15 = arith.index_cast %c1_i32 : i32 to index
    %c0_7 = arith.constant 0 : index
    %16 = vector.load %arg3[%15, %c0_7] : memref<8x128xf32, #tpu.memory_space<vmem>>, vector<1x128xf32>
    %17 = arith.subf %16, %10 : vector<1x128xf32>
    %18 = arith.mulf %14, %17 : vector<1x128xf32>
    %19 = arith.addf %10, %18 : vector<1x128xf32>
    %20 = arith.index_cast %c1_i32 : i32 to index
    %c0_8 = arith.constant 0 : index
    %21 = vector.load %arg5[%20, %c0_8] : memref<8x128xf32, #tpu.memory_space<vmem>>, vector<1x128xf32>
    tpu.vector_store %arg5[%20, %c0_8], %19 {strides = array<i32>} : memref<8x128xf32, #tpu.memory_space<vmem>>, vector<1x128xf32>,
    %c2_i32 = arith.constant 2 : i32
    %22 = arith.index_cast %c2_i32 : i32 to index
    %c0_9 = arith.constant 0 : index
    %23 = vector.load %arg2[%22, %c0_9] : memref<8x128xf32, #tpu.memory_space<vmem>>, vector<1x128xf32>
    %24 = arith.index_cast %c2_i32 : i32 to index
    %c0_10 = arith.constant 0 : index
    %25 = vector.load %arg3[%24, %c0_10] : memref<8x128xf32, #tpu.memory_space<vmem>>, vector<1x128xf32>
    %26 = arith.subf %25, %19 : vector<1x128xf32>
    %27 = arith.mulf %23, %26 : vector<1x128xf32>
    %28 = arith.addf %19, %27 : vector<1x128xf32>
    %29 = arith.index_cast %c2_i32 : i32 to index
    %c0_11 = arith.constant 0 : index
    %30 = vector.load %arg5[%29, %c0_11] : memref<8x128xf32, #tpu.memory_space<vmem>>, vector<1x128xf32>
    tpu.vector_store %arg5[%29, %c0_11], %28 {strides = array<i32>} : memref<8x128xf32, #tpu.memory_space<vmem>>, vector<1x128xf32>,
    %c3_i32 = arith.constant 3 : i32
    %31 = arith.index_cast %c3_i32 : i32 to index
    %c0_12 = arith.constant 0 : index
    %32 = vector.load %arg2[%31, %c0_12] : memref<8x128xf32, #tpu.memory_space<vmem>>, vector<1x128xf32>
    %33 = arith.index_cast %c3_i32 : i32 to index
    %c0_13 = arith.constant 0 : index
    %34 = vector.load %arg3[%33, %c0_13] : memref<8x128xf32, #tpu.memory_space<vmem>>, vector<1x128xf32>
    %35 = arith.subf %34, %28 : vector<1x128xf32>
    %36 = arith.mulf %32, %35 : vector<1x128xf32>
    %37 = arith.addf %28, %36 : vector<1x128xf32>
    %38 = arith.index_cast %c3_i32 : i32 to index
    %c0_14 = arith.constant 0 : index
    %39 = vector.load %arg5[%38, %c0_14] : memref<8x128xf32, #tpu.memory_space<vmem>>, vector<1x128xf32>
    tpu.vector_store %arg5[%38, %c0_14], %37 {strides = array<i32>} : memref<8x128xf32, #tpu.memory_space<vmem>>, vector<1x128xf32>,
    %c4_i32 = arith.constant 4 : i32
    %40 = arith.index_cast %c4_i32 : i32 to index
    %c0_15 = arith.constant 0 : index
    %41 = vector.load %arg2[%40, %c0_15] : memref<8x128xf32, #tpu.memory_space<vmem>>, vector<1x128xf32>
    %42 = arith.index_cast %c4_i32 : i32 to index
    %c0_16 = arith.constant 0 : index
    %43 = vector.load %arg3[%42, %c0_16] : memref<8x128xf32, #tpu.memory_space<vmem>>, vector<1x128xf32>
    %44 = arith.subf %43, %37 : vector<1x128xf32>
    %45 = arith.mulf %41, %44 : vector<1x128xf32>
    %46 = arith.addf %37, %45 : vector<1x128xf32>
    %47 = arith.index_cast %c4_i32 : i32 to index
    %c0_17 = arith.constant 0 : index
    %48 = vector.load %arg5[%47, %c0_17] : memref<8x128xf32, #tpu.memory_space<vmem>>, vector<1x128xf32>
    tpu.vector_store %arg5[%47, %c0_17], %46 {strides = array<i32>} : memref<8x128xf32, #tpu.memory_space<vmem>>, vector<1x128xf32>,
    %c5_i32 = arith.constant 5 : i32
    %49 = arith.index_cast %c5_i32 : i32 to index
    %c0_18 = arith.constant 0 : index
    %50 = vector.load %arg2[%49, %c0_18] : memref<8x128xf32, #tpu.memory_space<vmem>>, vector<1x128xf32>
    %51 = arith.index_cast %c5_i32 : i32 to index
    %c0_19 = arith.constant 0 : index
    %52 = vector.load %arg3[%51, %c0_19] : memref<8x128xf32, #tpu.memory_space<vmem>>, vector<1x128xf32>
    %53 = arith.subf %52, %46 : vector<1x128xf32>
    %54 = arith.mulf %50, %53 : vector<1x128xf32>
    %55 = arith.addf %46, %54 : vector<1x128xf32>
    %56 = arith.index_cast %c5_i32 : i32 to index
    %c0_20 = arith.constant 0 : index
    %57 = vector.load %arg5[%56, %c0_20] : memref<8x128xf32, #tpu.memory_space<vmem>>, vector<1x128xf32>
    tpu.vector_store %arg5[%56, %c0_20], %55 {strides = array<i32>} : memref<8x128xf32, #tpu.memory_space<vmem>>, vector<1x128xf32>,
    %c6_i32 = arith.constant 6 : i32
    %58 = arith.index_cast %c6_i32 : i32 to index
    %c0_21 = arith.constant 0 : index
    %59 = vector.load %arg2[%58, %c0_21] : memref<8x128xf32, #tpu.memory_space<vmem>>, vector<1x128xf32>
    %60 = arith.index_cast %c6_i32 : i32 to index
    %c0_22 = arith.constant 0 : index
    %61 = vector.load %arg3[%60, %c0_22] : memref<8x128xf32, #tpu.memory_space<vmem>>, vector<1x128xf32>
    %62 = arith.subf %61, %55 : vector<1x128xf32>
    %63 = arith.mulf %59, %62 : vector<1x128xf32>
    %64 = arith.addf %55, %63 : vector<1x128xf32>
    %65 = arith.index_cast %c6_i32 : i32 to index
    %c0_23 = arith.constant 0 : index
    %66 = vector.load %arg5[%65, %c0_23] : memref<8x128xf32, #tpu.memory_space<vmem>>, vector<1x128xf32>
    tpu.vector_store %arg5[%65, %c0_23], %64 {strides = array<i32>} : memref<8x128xf32, #tpu.memory_space<vmem>>, vector<1x128xf32>,
    %c7_i32 = arith.constant 7 : i32
    %67 = arith.index_cast %c7_i32 : i32 to index
    %c0_24 = arith.constant 0 : index
    %68 = vector.load %arg2[%67, %c0_24] : memref<8x128xf32, #tpu.memory_space<vmem>>, vector<1x128xf32>
    %69 = arith.index_cast %c7_i32 : i32 to index
    %c0_25 = arith.constant 0 : index
    %70 = vector.load %arg3[%69, %c0_25] : memref<8x128xf32, #tpu.memory_space<vmem>>, vector<1x128xf32>
    %71 = arith.subf %70, %64 : vector<1x128xf32>
    %72 = arith.mulf %68, %71 : vector<1x128xf32>
    %73 = arith.addf %64, %72 : vector<1x128xf32>
    %74 = arith.index_cast %c7_i32 : i32 to index
    %c0_26 = arith.constant 0 : index
    %75 = vector.load %arg5[%74, %c0_26] : memref<8x128xf32, #tpu.memory_space<vmem>>, vector<1x128xf32>
    tpu.vector_store %arg5[%74, %c0_26], %73 {strides = array<i32>} : memref<8x128xf32, #tpu.memory_space<vmem>>, vector<1x128xf32>,
    %c8_i32 = arith.constant 8 : i32
    %c0_27 = arith.constant 0 : index
    %c0_28 = arith.constant 0 : index
    %76 = vector.load %arg6[%c0_27, %c0_28] : memref<1x128xf32, #tpu.memory_space<vmem>>, vector<1x128xf32>
    tpu.vector_store %arg6[%c0_27, %c0_28], %73 {strides = array<i32>} : memref<1x128xf32, #tpu.memory_space<vmem>>, vector<1x128xf32>,
    return
  }
  func.func @transform_0(%arg0: i32, %arg1: i32) -> (i32, i32) {
    %c0_i32 = arith.constant 0 : i32
    return %arg1, %arg0 : i32, i32
  }
  func.func @transform_1(%arg0: i32, %arg1: i32) -> (i32, i32) {
    %c0_i32 = arith.constant 0 : i32
    return %arg1, %arg0 : i32, i32
  }
  func.func @transform_2(%arg0: i32, %arg1: i32) -> (i32, i32) {
    %c0_i32 = arith.constant 0 : i32
    %c0_i32_0 = arith.constant 0 : i32
    return %c0_i32, %arg0 : i32, i32
  }
  func.func @transform_3(%arg0: i32, %arg1: i32) -> (i32, i32) {
    %c0_i32 = arith.constant 0 : i32
    return %arg1, %arg0 : i32, i32
  }
}

</mosaic_0001>

<llo_original>
// kernel: tpu_custom_call.1
$region0: #{tpu_custom_call.1}
  #allocation0 [shape = 'u32[]', space=smem, size = 0x4, offset = 0x4, fixed_abs, tag = 'smem constant byte address 0x4 - core index']
  #allocation1 [shape = 'u32[144,128]{1,0:T(1,128)}', space=vmem, size = 0x12000, scoped, tag = 'internal scratch']
  #allocation2 [shape = 'f32[1,128]{1,0:T(1,128)}', space=vmem, size = 0x200, scoped, tag = 'scratch operand']
  %s0 = inlined_call_operand.hbm [shape: f32[8,128], index: 0, kind: input, shape index: {}]
  %s1 = inlined_call_operand.hbm [shape: f32[8,128], index: 1, kind: input, shape index: {}]
  %s2 = inlined_call_operand.vmem [shape: f32[1,128], index: 2, kind: input, shape index: {}]
  %s3 = inlined_call_operand.hbm [shape: f32[8,128], index: 3, kind: output, shape index: {}]
  %s4 = sld [smem:[#allocation0]]
  $region34: #{tpu_custom_call.1} parent=0
    _
  %s6 = ssub.s32 1, %s4
  %s7 = scalar_select 0, %s6, %s4
  $region1: #{tpu_custom_call.1} parent=0
    #allocation3 [shape = 'u8[4096]{0}', space=vmem, size = 0x1000, scoped, tag = 'input window, operand 0, single buffered']
    #allocation4 [shape = 's32[1]{0}', space=sflag, size = 0x4, scoped, tag = 'scoped memory for tpu_custom_call.1']
    #allocation5 [shape = 's32[1]{0}', space=sflag, size = 0x4, scoped, tag = 'scoped memory for tpu_custom_call.1']
    #allocation6 [shape = 'u8[4096]{0}', space=vmem, size = 0x1000, scoped, tag = 'input window, operand 1, single buffered']
    #allocation7 [shape = 's32[1]{0}', space=sflag, size = 0x4, scoped, tag = 'scoped memory for tpu_custom_call.1']
    #allocation8 [shape = 'u8[4096]{0}', space=vmem, size = 0x1000, scoped, tag = 'output window, operand 0, single buffered']
    %8 = vsyncpa [#allocation4], 0
    %9 = vsyncpa [#allocation7], 0
    %10 = vsyncpa [#allocation5], 0
    // Predicated region
    $region2: #{tpu_custom_call.1} parent=1 // pred_check
      _
    $region3: #{tpu_custom_call.1} parent=1 // pred_check_branch
      %12 = sbr.rel (0) target = $region5
    $region4: #{tpu_custom_call.1} parent=1 // pred_region
      %s14 = ssub.s32 128, 128
      %15 = vsyncadd [#allocation4], %s14
      %s17 = sshll.u32 [#allocation3], 4
      %s18 = int_to_ptr.vmem [resolvable:$true] %s17
      %20 = dma.hbm_to_vmem [thread:$0]  %s0, 128, %s18, [#allocation4]
    $region5: #{tpu_custom_call.1} parent=1 // pred_fallthru
      _
    // Predicated region
    $region6: #{tpu_custom_call.1} parent=1 // pred_check
      _
    $region7: #{tpu_custom_call.1} parent=1 // pred_check_branch
      %22 = sbr.rel (0) target = $region9
    $region8: #{tpu_custom_call.1} parent=1 // pred_region
      %s24 = ssub.s32 128, 128
      %25 = vsyncadd [#allocation7], %s24
      %s27 = sshll.u32 [#allocation6], 4
      %s28 = int_to_ptr.vmem [resolvable:$true] %s27
      %30 = dma.hbm_to_vmem [thread:$0]  %s1, 128, %s28, [#allocation7]
    $region9: #{tpu_custom_call.1} parent=1 // pred_fallthru
      _
    // Predicated region
    $region10: #{tpu_custom_call.1} parent=1 // pred_check
      _
    $region11: #{tpu_custom_call.1} parent=1 // pred_check_branch
      %32 = sbr.rel (0) target = $region13
    $region12: #{tpu_custom_call.1} parent=1 // pred_region
      _
    $region13: #{tpu_custom_call.1} parent=1 // pred_fallthru
      _
    // Predicated region
    $region14: #{tpu_custom_call.1} parent=1 // pred_check
      _
    $region15: #{tpu_custom_call.1} parent=1 // pred_check_branch
      %34 = sbr.rel (0) target = $region17
    $region16: #{tpu_custom_call.1} parent=1 // pred_region
      %35 = dma.done [#allocation4], 128
    $region17: #{tpu_custom_call.1} parent=1 // pred_fallthru
      _
    // Predicated region
    $region18: #{tpu_custom_call.1} parent=1 // pred_check
      _
    $region19: #{tpu_custom_call.1} parent=1 // pred_check_branch
      %37 = sbr.rel (0) target = $region21
    $region20: #{tpu_custom_call.1} parent=1 // pred_region
      %38 = dma.done [#allocation7], 128
    $region21: #{tpu_custom_call.1} parent=1 // pred_fallthru
      _
    %p39 = scmp.eq.s32.totalorder 0, 0
    // Predicated region
    $region22: #{tpu_custom_call.1} parent=1 // pred_check
      %p40 = pneg %p39
    $region23: #{tpu_custom_call.1} parent=1 // pred_check_branch
      %42 = sbr.rel (%p40) target = $region25
    $region24: #{tpu_custom_call.1} parent=1 // pred_region
      %v43 = vld [vmem:[%s2] sm:$0x1]
      %44 = vst [vmem:[#allocation2] sm:$0x1] %v43
    $region25: #{tpu_custom_call.1} parent=1 // pred_fallthru
      _
    %v45 = vld [vmem:[#allocation2] sm:$0x1]
    %v46 = vld [vmem:[#allocation3] sm:$0x1]
    %v47 = vld [vmem:[#allocation6] sm:$0x1]
    %v48 = vsub.f32 %v47, %v45
    %v49 = vmul.f32 %v46, %v48
    %v50 = vadd.f32 %v45, %v49
    %51 = vst [vmem:[#allocation8] sm:$0x1] %v50
    %v52 = vld [vmem:[#allocation3 + $0x1] sm:$0x1]
    %v53 = vld [vmem:[#allocation6 + $0x1] sm:$0x1]
    %v54 = vsub.f32 %v53, %v50
    %v55 = vmul.f32 %v52, %v54
    %v56 = vadd.f32 %v50, %v55
    %57 = vst [vmem:[#allocation8 + $0x1] sm:$0x1] %v56
    %v58 = vld [vmem:[#allocation3 + $0x2] sm:$0x1]
    %v59 = vld [vmem:[#allocation6 + $0x2] sm:$0x1]
    %v60 = vsub.f32 %v59, %v56
    %v61 = vmul.f32 %v58, %v60
    %v62 = vadd.f32 %v56, %v61
    %63 = vst [vmem:[#allocation8 + $0x2] sm:$0x1] %v62
    %v64 = vld [vmem:[#allocation3 + $0x3] sm:$0x1]
    %v65 = vld [vmem:[#allocation6 + $0x3] sm:$0x1]
    %v66 = vsub.f32 %v65, %v62
    %v67 = vmul.f32 %v64, %v66
    %v68 = vadd.f32 %v62, %v67
    %69 = vst [vmem:[#allocation8 + $0x3] sm:$0x1] %v68
    %v70 = vld [vmem:[#allocation3 + $0x4] sm:$0x1]
    %v71 = vld [vmem:[#allocation6 + $0x4] sm:$0x1]
    %v72 = vsub.f32 %v71, %v68
    %v73 = vmul.f32 %v70, %v72
    %v74 = vadd.f32 %v68, %v73
    %75 = vst [vmem:[#allocation8 + $0x4] sm:$0x1] %v74
    %v76 = vld [vmem:[#allocation3 + $0x5] sm:$0x1]
    %v77 = vld [vmem:[#allocation6 + $0x5] sm:$0x1]
    %v78 = vsub.f32 %v77, %v74
    %v79 = vmul.f32 %v76, %v78
    %v80 = vadd.f32 %v74, %v79
    %81 = vst [vmem:[#allocation8 + $0x5] sm:$0x1] %v80
    %v82 = vld [vmem:[#allocation3 + $0x6] sm:$0x1]
    %v83 = vld [vmem:[#allocation6 + $0x6] sm:$0x1]
    %v84 = vsub.f32 %v83, %v80
    %v85 = vmul.f32 %v82, %v84
    %v86 = vadd.f32 %v80, %v85
    %87 = vst [vmem:[#allocation8 + $0x6] sm:$0x1] %v86
    %v88 = vld [vmem:[#allocation3 + $0x7] sm:$0x1]
    %v89 = vld [vmem:[#allocation6 + $0x7] sm:$0x1]
    %v90 = vsub.f32 %v89, %v86
    %v91 = vmul.f32 %v88, %v90
    %v92 = vadd.f32 %v86, %v91
    %93 = vst [vmem:[#allocation8 + $0x7] sm:$0x1] %v92
    %94 = vst [vmem:[#allocation2] sm:$0x1] %v92
    // Predicated region
    $region26: #{tpu_custom_call.1} parent=1 // pred_check
      _
    $region27: #{tpu_custom_call.1} parent=1 // pred_check_branch
      %96 = sbr.rel (0) target = $region29
    $region28: #{tpu_custom_call.1} parent=1 // pred_region
      %s98 = ssub.s32 128, 128
      %99 = vsyncadd [#allocation5], %s98
      %s101 = sshll.u32 [#allocation8], 4
      %s102 = int_to_ptr.vmem [resolvable:$true] %s101
      %104 = dma.vmem_to_hbm [thread:$0]  %s102, 128, %s3, [#allocation5]
    $region29: #{tpu_custom_call.1} parent=1 // pred_fallthru
      _
    // Predicated region
    $region30: #{tpu_custom_call.1} parent=1 // pred_check
      _
    $region31: #{tpu_custom_call.1} parent=1 // pred_check_branch
      %106 = sbr.rel (0) target = $region33
    $region32: #{tpu_custom_call.1} parent=1 // pred_region
      %107 = dma.done [#allocation5], 128
    $region33: #{tpu_custom_call.1} parent=1 // pred_fallthru
      _
    %108 = vsyncpa [#allocation4], 1
    %109 = vsyncpa [#allocation7], 1
    %110 = vsyncpa [#allocation5], 1

</llo_original>
